<compile_context>
chip_gen: v5e
topology: v5e:2x2
jax: 0.10.0
libtpu: 0.0.40
codegen_flags: <defaults>
</compile_context>

<pallas_src>
import jax
import jax.numpy as jnp
from jax.experimental import pallas as pl
from jax.experimental.pallas import tpu as pltpu


def _patch_embed_kernel(patches_ref, w_ref, bias_ref, out_ref):
    # patches_ref : (BB, R, P)  R = num_patches + 1; row 0 of each image is all-zero (CLS slot)
    # w_ref       : (P, Ep)     projection weight (patch_dim x padded embed dim), compute dtype
    # bias_ref    : (R, Ep)     row 0 = cls + pos[0]; rows 1: = pos[1:] + conv bias   (f32)
    # out_ref     : (BB, R, Ep)
    bb = patches_ref.shape[0]
    w = w_ref[...]          # hoisted out of the loop
    bias = bias_ref[...]
    # Statically unrolled per-image 2-D MXU matmuls: avoids the (BB*R, P) reshape relayout
    # when R is not a sublane multiple; every store is a full, tile-aligned (R, Ep) slab.
    for i in range(bb):
        proj = jnp.dot(patches_ref[i], w, preferred_element_type=jnp.float32)
        out_ref[i] = (proj + bias).astype(out_ref.dtype)


def _vmem_budget_bytes():
    """Usable VMEM budget, generation-aware (v5e/v6e: 128 MiB, v7x: 64 MiB per core)."""
    try:
        info = pltpu.get_tpu_info()
        cap = int(getattr(info, "vmem_capacity_bytes", 0) or 0)
        if cap > 0:
            return cap * 3 // 4          # leave headroom for Mosaic scratch
    except Exception:
        pass
    return 48 * 1024 * 1024              # conservative fallback: safe on v7x's 64 MiB VMEM


def _pick_block_b(batch, rows, per_image_bytes, param_bytes, vmem_budget, target_rows=1024):
    """Images per grid step: aim for >= target_rows MXU rows, stay within the VMEM budget,
    divide the batch exactly, and keep >= 2 grid steps so v7x's two TCs both get work."""
    bb_rows = max(1, -(-target_rows // rows))
    avail = max(vmem_budget - param_bytes, per_image_bytes)
    bb_mem = max(1, avail // per_image_bytes)
    bb = int(min(batch, bb_rows, bb_mem))
    if bb >= batch and batch >= 2:       # keep the grid >= 2 steps (megacore sharding)
        bb = batch // 2
    bb = max(bb, 1)
    while batch % bb:
        bb -= 1
    return bb


def patch_embedding_forward(x, conv_w, conv_b, cls_token, pos_embed, patch_size,
                            compute_dtype=jnp.bfloat16, out_dtype=None, block_b=None):
    """x: (B, C, H, W) NCHW.  Returns (B, num_patches + 1, embed_dim) in out_dtype (x.dtype)."""
    B, C, H, W = x.shape
    p = patch_size
    if H % p or W % p:
        raise ValueError("Image dimensions must be divisible by patch_size.")
    nph, npw = H // p, W // p
    N = nph * npw
    R = N + 1
    E = conv_w.shape[0]
    P = C * p * p

    if compute_dtype is None:
        compute_dtype = x.dtype
    out_dtype = out_dtype if out_dtype is not None else x.dtype

    # ---- wrapper glue: patchify NCHW -> (B, R, P) with a leading all-zero CLS row ----
    # Flatten order (C, kh, kw) matches nn.Conv2d's contraction order.  The dtype cast and
    # the zero-row prepend fuse into the same XLA transpose pass.
    xp = x.astype(compute_dtype)
    patches = xp.reshape(B, C, nph, p, npw, p)
    patches = patches.transpose(0, 2, 4, 1, 3, 5).reshape(B, N, P)
    patches = jnp.concatenate([jnp.zeros((B, 1, P), compute_dtype), patches], axis=1)  # (B,R,P)

    # ---- fold parameters: (P, Ep) weight and (R, Ep) additive bias, lane-dense Ep ----
    Ep = 128 * (-(-E // 128))                                           # pad embed dim to 128 lanes
    w_mat = conv_w.reshape(E, P).T.astype(compute_dtype)                # (P, E)
    pos = pos_embed.reshape(R, E).astype(jnp.float32)
    bias = jnp.concatenate(
        [cls_token.reshape(1, E).astype(jnp.float32) + pos[0:1],
         pos[1:] + conv_b.reshape(1, E).astype(jnp.float32)], axis=0)   # (R, E) f32
    if Ep != E:
        w_mat = jnp.pad(w_mat, ((0, 0), (0, Ep - E)))
        bias = jnp.pad(bias, ((0, 0), (0, Ep - E)))

    # ---- block size from a generation-aware VMEM budget ----
    bytes_c = jnp.dtype(compute_dtype).itemsize
    bytes_o = jnp.dtype(out_dtype).itemsize
    per_image = 2 * R * P * bytes_c + 2 * R * Ep * bytes_o              # double-buffered in/out
    param_bytes = 2 * (P * Ep * bytes_c + R * Ep * 4)                   # worst-case double-buffered
    budget = int(_vmem_budget_bytes())
    BB = block_b if block_b is not None else _pick_block_b(B, R, per_image, param_bytes, budget)
    assert B % BB == 0
    grid = (B // BB,)

    out_shape = jax.ShapeDtypeStruct((B, R, Ep), out_dtype)

    def build_and_call(param_buffering):
        pm = {} if param_buffering is None else {"pipeline_mode": pl.Buffered(param_buffering)}
        grid_spec = pl.GridSpec(
            grid=grid,
            in_specs=[
                pl.BlockSpec((BB, R, P), lambda b: (b, 0, 0)),
                pl.BlockSpec((P, Ep), lambda b: (0, 0), **pm),
                pl.BlockSpec((R, Ep), lambda b: (0, 0), **pm),
            ],
            out_specs=pl.BlockSpec((BB, R, Ep), lambda b: (b, 0, 0)),
        )
        return pl.pallas_call(
            _patch_embed_kernel,
            out_shape=out_shape,
            grid_spec=grid_spec,
            compiler_params=pltpu.CompilerParams(
                dimension_semantics=("parallel",),
                vmem_limit_bytes=budget,
            ),
        )(patches, w_mat, bias)

    try:
        # Single-buffer the grid-invariant operands (constant index_map) to free VMEM headroom.
        out = build_and_call(1)
    except Exception:
        out = build_and_call(None)   # fallback: default double-buffering

    if Ep != E:
        out = out[:, :, :E]
    return out


def _reference(x, conv_w, conv_b, cls_token, pos_embed, patch_size):
    """Pure-JAX reference mirroring the PyTorch forward (Conv2d + flatten + cat + add)."""
    B = x.shape[0]
    E = conv_w.shape[0]
    y = jax.lax.conv_general_dilated(
        x, conv_w, window_strides=(patch_size, patch_size), padding="VALID",
        dimension_numbers=("NCHW", "OIHW", "NCHW"))            # (B, E, H/p, W/p)
    y = y + conv_b[None, :, None, None]
    y = y.reshape(B, E, -1).transpose(0, 2, 1)                 # (B, N, E)
    cls = jnp.broadcast_to(cls_token.reshape(1, 1, E), (B, 1, E))
    return jnp.concatenate([cls, y], axis=1) + pos_embed       # (B, N+1, E)


if __name__ == "__main__":
    B, C, H, W = 2, 4, 16, 16
    patch_size = 4
    embed_dim = 32
    num_patches = (H // patch_size) * (W // patch_size)        # 16
    patch_dim = C * patch_size * patch_size                    # 64

    key = jax.random.PRNGKey(0)
    k_x, k_w, k_b, k_cls, k_pos = jax.random.split(key, 5)

    x = jax.random.normal(k_x, (B, C, H, W), dtype=jnp.float32)
    conv_w = 0.05 * jax.random.normal(k_w, (embed_dim, C, patch_size, patch_size),
                                      dtype=jnp.float32)
    conv_b = 0.05 * jax.random.normal(k_b, (embed_dim,), dtype=jnp.float32)
    cls_token = 0.02 * jax.random.truncated_normal(
        k_cls, -2.0, 2.0, (1, 1, embed_dim), dtype=jnp.float32)
    pos_embed = 0.02 * jax.random.truncated_normal(
        k_pos, -2.0, 2.0, (1, num_patches + 1, embed_dim), dtype=jnp.float32)

    ref = _reference(x, conv_w, conv_b, cls_token, pos_embed, patch_size)

    # Exact-compute path (f32 patches/weights), strict tolerance.
    out_f32 = patch_embedding_forward(x, conv_w, conv_b, cls_token, pos_embed, patch_size,
                                      compute_dtype=jnp.float32)
    out_f32 = jax.block_until_ready(out_f32)
    assert out_f32.shape == (B, num_patches + 1, embed_dim), out_f32.shape
    assert jnp.allclose(out_f32, ref, atol=1e-4, rtol=1e-4), "f32 mismatch vs reference"

    # Default path: bf16 compute (f32 accumulation + f32 additive params), looser tolerance.
    out_bf16 = patch_embedding_forward(x, conv_w, conv_b, cls_token, pos_embed, patch_size)
    out_bf16 = jax.block_until_ready(out_bf16)
    assert out_bf16.shape == (B, num_patches + 1, embed_dim), out_bf16.shape
    assert jnp.allclose(out_bf16, ref, atol=5e-2, rtol=5e-2), "bf16 mismatch vs reference"

    print("KERNEL_OK")
</pallas_src>

<mosaic_0001>
module attributes {stable_mosaic.version = 11 : i64} {
  func.func @_patch_embed_kernel(%arg0: i32, %arg1: memref<1x17x64xf32, #tpu.memory_space<vmem>>, %arg2: memref<64x128xf32, #tpu.memory_space<vmem>>, %arg3: memref<17x128xf32, #tpu.memory_space<vmem>>, %arg4: memref<1x17x128xf32, #tpu.memory_space<vmem>>) attributes {dimension_semantics = [#tpu.dimension_semantics<parallel>], iteration_bounds = array<i64: 2>, scalar_prefetch = 0 : i64, scratch_operands = 0 : i64, tpu.core_type = #tpu.core_type<tc>, window_params = [{transform_indices = @transform_0, window_bounds = array<i64: 1, 17, 64>}, {pipeline_mode = #tpu.pipeline_mode<synchronous>, transform_indices = @transform_1, window_bounds = array<i64: 64, 128>}, {pipeline_mode = #tpu.pipeline_mode<synchronous>, transform_indices = @transform_2, window_bounds = array<i64: 17, 128>}, {transform_indices = @transform_3, window_bounds = array<i64: 1, 17, 128>}]} {
    %c0 = arith.constant 0 : index
    %c0_0 = arith.constant 0 : index
    %0 = vector.load %arg2[%c0, %c0_0] : memref<64x128xf32, #tpu.memory_space<vmem>>, vector<64x128xf32>
    %c0_1 = arith.constant 0 : index
    %c0_2 = arith.constant 0 : index
    %1 = vector.load %arg3[%c0_1, %c0_2] : memref<17x128xf32, #tpu.memory_space<vmem>>, vector<17x128xf32>
    %c0_3 = arith.constant 0 : index
    %c0_4 = arith.constant 0 : index
    %c0_5 = arith.constant 0 : index
    %2 = vector.load %arg1[%c0_3, %c0_4, %c0_5] : memref<1x17x64xf32, #tpu.memory_space<vmem>>, vector<1x17x64xf32>
    %3 = vector.shape_cast %2 : vector<1x17x64xf32> to vector<17x64xf32>
    %cst = arith.constant dense<0.000000e+00> : vector<17x128xf32>
    %4 = tpu.matmul %3, %0, %cst {dimension_numbers = #tpu.dot_dimension_numbers<[1], [0], [0], [1], [0, 0, 1, 1], [], []>} : vector<17x64xf32>, vector<64x128xf32>, vector<17x128xf32> -> vector<17x128xf32>
    %5 = arith.addf %4, %1 : vector<17x128xf32>
    %c0_6 = arith.constant 0 : index
    %c0_7 = arith.constant 0 : index
    %c0_8 = arith.constant 0 : index
    %6 = vector.load %arg4[%c0_6, %c0_7, %c0_8] : memref<1x17x128xf32, #tpu.memory_space<vmem>>, vector<1x17x128xf32>
    %7 = vector.shape_cast %6 : vector<1x17x128xf32> to vector<17x128xf32>
    %8 = vector.shape_cast %5 : vector<17x128xf32> to vector<1x17x128xf32>
    tpu.vector_store %arg4[%c0_6, %c0_7, %c0_8], %8 {strides = array<i32>} : memref<1x17x128xf32, #tpu.memory_space<vmem>>, vector<1x17x128xf32>,
    return
  }
  func.func @transform_0(%arg0: i32) -> (i32, i32, i32) {
    %c0_i32 = arith.constant 0 : i32
    %c0_i32_0 = arith.constant 0 : i32
    %c0_i32_1 = arith.constant 0 : i32
    return %arg0, %c0_i32, %c0_i32_0 : i32, i32, i32
  }
  func.func @transform_1(%arg0: i32) -> (i32, i32) {
    %c0_i32 = arith.constant 0 : i32
    %c0_i32_0 = arith.constant 0 : i32
    %c0_i32_1 = arith.constant 0 : i32
    return %c0_i32, %c0_i32_0 : i32, i32
  }
  func.func @transform_2(%arg0: i32) -> (i32, i32) {
    %c0_i32 = arith.constant 0 : i32
    %c0_i32_0 = arith.constant 0 : i32
    %c0_i32_1 = arith.constant 0 : i32
    return %c0_i32, %c0_i32_0 : i32, i32
  }
  func.func @transform_3(%arg0: i32) -> (i32, i32, i32) {
    %c0_i32 = arith.constant 0 : i32
    %c0_i32_0 = arith.constant 0 : i32
    %c0_i32_1 = arith.constant 0 : i32
    return %arg0, %c0_i32, %c0_i32_0 : i32, i32, i32
  }
}

module attributes {stable_mosaic.version = 11 : i64} {
  func.func @_patch_embed_kernel(%arg0: i32, %arg1: memref<1x17x64xf32, #tpu.memory_space<vmem>>, %arg2: memref<64x128xf32, #tpu.memory_space<vmem>>, %arg3: memref<17x128xf32, #tpu.memory_space<vmem>>, %arg4: memref<1x17x128xf32, #tpu.memory_space<vmem>>) attributes {dimension_semantics = [#tpu.dimension_semantics<parallel>], iteration_bounds = array<i64: 2>, scalar_prefetch = 0 : i64, scratch_operands = 0 : i64, tpu.core_type = #tpu.core_type<tc>, window_params = [{transform_indices = @transform_0, window_bounds = array<i64: 1, 17, 64>}, {pipeline_mode = #tpu.pipeline_mode<synchronous>, transform_indices = @transform_1, window_bounds = array<i64: 64, 128>}, {pipeline_mode = #tpu.pipeline_mode<synchronous>, transform_indices = @transform_2, window_bounds = array<i64: 17, 128>}, {transform_indices = @transform_3, window_bounds = array<i64: 1, 17, 128>}]} {
    %c0 = arith.constant 0 : index
    %c0_0 = arith.constant 0 : index
    %0 = vector.load %arg2[%c0, %c0_0] : memref<64x128xf32, #tpu.memory_space<vmem>>, vector<64x128xf32>
    %c0_1 = arith.constant 0 : index
    %c0_2 = arith.constant 0 : index
    %1 = vector.load %arg3[%c0_1, %c0_2] : memref<17x128xf32, #tpu.memory_space<vmem>>, vector<17x128xf32>
    %c0_3 = arith.constant 0 : index
    %c0_4 = arith.constant 0 : index
    %c0_5 = arith.constant 0 : index
    %2 = vector.load %arg1[%c0_3, %c0_4, %c0_5] : memref<1x17x64xf32, #tpu.memory_space<vmem>>, vector<1x17x64xf32>
    %3 = vector.shape_cast %2 : vector<1x17x64xf32> to vector<17x64xf32>
    %cst = arith.constant dense<0.000000e+00> : vector<17x128xf32>
    %4 = tpu.matmul %3, %0, %cst {dimension_numbers = #tpu.dot_dimension_numbers<[1], [0], [0], [1], [0, 0, 1, 1], [], []>} : vector<17x64xf32>, vector<64x128xf32>, vector<17x128xf32> -> vector<17x128xf32>
    %5 = arith.addf %4, %1 : vector<17x128xf32>
    %c0_6 = arith.constant 0 : index
    %c0_7 = arith.constant 0 : index
    %c0_8 = arith.constant 0 : index
    %6 = vector.load %arg4[%c0_6, %c0_7, %c0_8] : memref<1x17x128xf32, #tpu.memory_space<vmem>>, vector<1x17x128xf32>
    %7 = vector.shape_cast %6 : vector<1x17x128xf32> to vector<17x128xf32>
    %8 = vector.shape_cast %5 : vector<17x128xf32> to vector<1x17x128xf32>
    tpu.vector_store %arg4[%c0_6, %c0_7, %c0_8], %8 {strides = array<i32>} : memref<1x17x128xf32, #tpu.memory_space<vmem>>, vector<1x17x128xf32>,
    return
  }
  func.func @transform_0(%arg0: i32) -> (i32, i32, i32) {
    %c0_i32 = arith.constant 0 : i32
    %c0_i32_0 = arith.constant 0 : i32
    %c0_i32_1 = arith.constant 0 : i32
    return %arg0, %c0_i32, %c0_i32_0 : i32, i32, i32
  }
  func.func @transform_1(%arg0: i32) -> (i32, i32) {
    %c0_i32 = arith.constant 0 : i32
    %c0_i32_0 = arith.constant 0 : i32
    %c0_i32_1 = arith.constant 0 : i32
    return %c0_i32, %c0_i32_0 : i32, i32
  }
  func.func @transform_2(%arg0: i32) -> (i32, i32) {
    %c0_i32 = arith.constant 0 : i32
    %c0_i32_0 = arith.constant 0 : i32
    %c0_i32_1 = arith.constant 0 : i32
    return %c0_i32, %c0_i32_0 : i32, i32
  }
  func.func @transform_3(%arg0: i32) -> (i32, i32, i32) {
    %c0_i32 = arith.constant 0 : i32
    %c0_i32_0 = arith.constant 0 : i32
    %c0_i32_1 = arith.constant 0 : i32
    return %arg0, %c0_i32, %c0_i32_0 : i32, i32, i32
  }
}

</mosaic_0001>

<llo_original>
// kernel: tpu_custom_call.1
$region0: #{tpu_custom_call.1}
  #allocation0 [shape = 'u32[]', space=smem, size = 0x4, offset = 0x4, fixed_abs, tag = 'smem constant byte address 0x4 - core index']
  #allocation1 [shape = 'u32[72,128]{1,0:T(1,128)}', space=vmem, size = 0x9000, scoped, tag = 'internal scratch']
  %s0 = inlined_call_operand.vmem [shape: f32[2,17,64], index: 0, kind: input, shape index: {}]
  %s1 = inlined_call_operand.vmem [shape: f32[64,128], index: 1, kind: input, shape index: {}]
  %s2 = inlined_call_operand.hbm [shape: f32[17,128], index: 2, kind: input, shape index: {}]
  %s3 = inlined_call_operand.vmem [shape: f32[2,17,128], index: 3, kind: output, shape index: {}]
  %s4 = sld [smem:[#allocation0]]
  $region49: #{tpu_custom_call.1} parent=0
    _
  %s6 = ssub.s32 1, %s4
  %s7 = scalar_select 0, %s6, %s4
  $region1: #{tpu_custom_call.1} parent=0
    #allocation2 [shape = 'u8[12288]{0}', space=vmem, size = 0x3000, scoped, tag = 'input window, operand 2, single buffered']
    #allocation3 [shape = 's32[2]{0}', space=sflag, size = 0x8, scoped, tag = 'scoped memory for tpu_custom_call.1']
    %8 = vsyncpa [#allocation3], 0
    loop: start=0, step=1, limit=4
    $region2: #{tpu_custom_call.1} parent=1 // loop_pre_header
      _
    $region3: #{tpu_custom_call.1} parent=1 // loop_header
      %s10 = sphi 0, %s14
      %p11 = scmp.ge.s32.totalorder %s10, 4
      %s20 = sphi 0, %s22
      %s23 = sphi 0, %s20
      %s24 = sphi 0, %s23
      %s40 = sphi 0, %s24
      %s44 = sphi 0, %s44
      %s46 = sphi 0, %s44
      %s47 = sphi 0, %s46
      %s61 = sphi 0, %s47
      %s65 = sphi 0, %s65
      %s67 = sphi 0, %s65
      %s68 = sphi 0, %s67
      %s82 = sphi 0, %s68
      %s88 = sphi 0, %s90
      %s91 = sphi 0, %s88
      %s92 = sphi 0, %s91
      %s108 = sphi 0, %s92
    $region4: #{tpu_custom_call.1} parent=1 // loop_header_branch
      %13 = sbr.rel (%p11) target = $region8
    $region5: #{tpu_custom_call.1} parent=1 // loop_body
      %s15 = ssub.s32 %s10, 1
      %s16 = ssub.s32 %s10, 2
      %s17 = sadd.s32 %s10, 1
      %s18 = ssub.s32 %s10, %s17
      %p19 = scmp.eq.s32.totalorder %s18, 0
      %s21 = sadd.s32 %s20, 1
      %s22 = scalar_select %p19, %s20, %s21
      %p25 = pneg %p19
      %p26 = scmp.eq.s32.totalorder %s10, 1
      %p27 = por %p25, %p26
      %p28 = scmp.ne.s32.totalorder %s20, %s23
      %p29 = scmp.eq.s32.totalorder %s10, 0
      %p30 = por %p28, %p29
      %p31 = scmp.ne.s32.totalorder %s20, %s23
      %p32 = scmp.eq.s32.totalorder %s15, 1
      %p33 = por %p31, %p32
      %p34 = scmp.ne.s32.totalorder %s23, %s24
      %p35 = scmp.eq.s32.totalorder %s15, 0
      %p36 = por %p34, %p35
      %p37 = scmp.ne.s32.totalorder %s23, %s24
      %p38 = scmp.eq.s32.totalorder %s16, 1
      %p39 = por %p37, %p38
      %p41 = scmp.ne.s32.totalorder %s24, %s40
      %p42 = scmp.eq.s32.totalorder %s16, 0
      %p43 = por %p41, %p42
      %s45 = sadd.s32 %s44, 1
      %p48 = scmp.eq.s32.totalorder %s10, 1
      %p49 = scmp.ne.s32.totalorder %s44, %s46
      %p50 = scmp.eq.s32.totalorder %s10, 0
      %p51 = por %p49, %p50
      %p52 = scmp.ne.s32.totalorder %s44, %s46
      %p53 = scmp.eq.s32.totalorder %s15, 1
      %p54 = por %p52, %p53
      %p55 = scmp.ne.s32.totalorder %s46, %s47
      %p56 = scmp.eq.s32.totalorder %s15, 0
      %p57 = por %p55, %p56
      %p58 = scmp.ne.s32.totalorder %s46, %s47
      %p59 = scmp.eq.s32.totalorder %s16, 1
      %p60 = por %p58, %p59
      %p62 = scmp.ne.s32.totalorder %s47, %s61
      %p63 = scmp.eq.s32.totalorder %s16, 0
      %p64 = por %p62, %p63
      %s66 = sadd.s32 %s65, 1
      %p69 = scmp.eq.s32.totalorder %s10, 1
      %p70 = scmp.ne.s32.totalorder %s65, %s67
      %p71 = scmp.eq.s32.totalorder %s10, 0
      %p72 = por %p70, %p71
      %p73 = scmp.ne.s32.totalorder %s65, %s67
      %p74 = scmp.eq.s32.totalorder %s15, 1
      %p75 = por %p73, %p74
      %p76 = scmp.ne.s32.totalorder %s67, %s68
      %p77 = scmp.eq.s32.totalorder %s15, 0
      %p78 = por %p76, %p77
      %p79 = scmp.ne.s32.totalorder %s67, %s68
      %p80 = scmp.eq.s32.totalorder %s16, 1
      %p81 = por %p79, %p80
      %p83 = scmp.ne.s32.totalorder %s68, %s82
      %p84 = scmp.eq.s32.totalorder %s16, 0
      %p85 = por %p83, %p84
      %s86 = ssub.s32 %s10, %s17
      %p87 = scmp.eq.s32.totalorder %s86, 0
      %s89 = sadd.s32 %s88, 1
      %s90 = scalar_select %p87, %s88, %s89
      %p93 = pneg %p87
      %p94 = scmp.eq.s32.totalorder %s10, 1
      %p95 = por %p93, %p94
      %p96 = scmp.ne.s32.totalorder %s88, %s91
      %p97 = scmp.eq.s32.totalorder %s10, 0
      %p98 = por %p96, %p97
      %p99 = scmp.ne.s32.totalorder %s88, %s91
      %p100 = scmp.eq.s32.totalorder %s15, 1
      %p101 = por %p99, %p100
      %p102 = scmp.ne.s32.totalorder %s91, %s92
      %p103 = scmp.eq.s32.totalorder %s15, 0
      %p104 = por %p102, %p103
      %p105 = scmp.ne.s32.totalorder %s91, %s92
      %p106 = scmp.eq.s32.totalorder %s16, 1
      %p107 = por %p105, %p106
      %p109 = scmp.ne.s32.totalorder %s92, %s108
      %p110 = scmp.eq.s32.totalorder %s16, 0
      %p111 = por %p109, %p110
      %p112 = scmp.le.s32.totalorder 1, %s10
      %p113 = scmp.lt.s32.totalorder %s10, 3
      %p114 = pnand %p112, %p113
      %p115 = pneg %p114
      // Predicated region
      $region9: #{tpu_custom_call.1} parent=5 // pred_check
        _
      $region10: #{tpu_custom_call.1} parent=5 // pred_check_branch
        %117 = sbr.rel (%p114) target = $region12
      $region11: #{tpu_custom_call.1} parent=5 // pred_region
        %s118 = ssub.s32 %s10, 1
        // Predicated region
        $region13: #{tpu_custom_call.1} parent=11 // pred_check
          %p119 = pneg %p57
        $region14: #{tpu_custom_call.1} parent=11 // pred_check_branch
          %121 = sbr.rel (%p119) target = $region16
        $region15: #{tpu_custom_call.1} parent=11 // pred_region
          _
        $region16: #{tpu_custom_call.1} parent=11 // pred_fallthru
          _
        // Predicated region
        $region17: #{tpu_custom_call.1} parent=11 // pred_check
          %p122 = pneg %p78
        $region18: #{tpu_custom_call.1} parent=11 // pred_check_branch
          %124 = sbr.rel (%p122) target = $region20
        $region19: #{tpu_custom_call.1} parent=11 // pred_region
          %126 = vsyncadd [#allocation3], 0
          %s127 = sshll.u32 %s2, 4
          %s128 = int_to_ptr.hbm [resolvable:$true] %s127
          %s129 = sshll.u32 [#allocation2], 4
          %s130 = int_to_ptr.vmem [resolvable:$true] %s129
          %135 = dma.hbm_to_vmem [thread:$0]  %s128, 384, %s130, [#allocation3], 128, 128, 8
        $region20: #{tpu_custom_call.1} parent=11 // pred_fallthru
          _
      $region12: #{tpu_custom_call.1} parent=5 // pred_fallthru
        _
      %p136 = scmp.lt.s32.totalorder %s10, 2
      // Predicated region
      $region21: #{tpu_custom_call.1} parent=5 // pred_check
        %p137 = pneg %p136
      $region22: #{tpu_custom_call.1} parent=5 // pred_check_branch
        %139 = sbr.rel (%p137) target = $region24
      $region23: #{tpu_custom_call.1} parent=5 // pred_region
        // Predicated region
        $region25: #{tpu_custom_call.1} parent=23 // pred_check
          %p140 = pneg %p30
        $region26: #{tpu_custom_call.1} parent=23 // pred_check_branch
          %142 = sbr.rel (%p140) target = $region28
        $region27: #{tpu_custom_call.1} parent=23 // pred_region
          %p143 = scmp.lt.s32.totalorder %s10, 1
          %s144 = scalar_select %p143, %s10, 1
          %s145 = smul.addr %s144, 3
          %s146 = smul.addr %s145, 8
          %s147 = scalar_lea.vmem %s0, %s146
        $region28: #{tpu_custom_call.1} parent=23 // pred_fallthru
          _
      $region24: #{tpu_custom_call.1} parent=5 // pred_fallthru
        _
      %p148 = scmp.le.s32.totalorder 1, %s10
      %p149 = scmp.lt.s32.totalorder %s10, 3
      %p150 = pnand %p148, %p149
      %p151 = pneg %p150
      // Predicated region
      $region29: #{tpu_custom_call.1} parent=5 // pred_check
        _
      $region30: #{tpu_custom_call.1} parent=5 // pred_check_branch
        %153 = sbr.rel (%p150) target = $region32
      $region31: #{tpu_custom_call.1} parent=5 // pred_region
        %s154 = ssub.s32 %s10, 1
        // Predicated region
        $region33: #{tpu_custom_call.1} parent=31 // pred_check
          %p155 = pneg %p78
        $region34: #{tpu_custom_call.1} parent=31 // pred_check_branch
          %157 = sbr.rel (%p155) target = $region36
        $region35: #{tpu_custom_call.1} parent=31 // pred_region
          %159 = dma.done [#allocation3], 384
        $region36: #{tpu_custom_call.1} parent=31 // pred_fallthru
          _
        %p160 = scmp.lt.s32.totalorder %s15, 1
        %s161 = scalar_select %p160, %s15, 1
        %s162 = smul.addr %s161, 3
        %s163 = smul.addr %s162, 8
        %s164 = scalar_lea.vmem %s0, %s163
        %p165 = pneg %p36
        %p166 = pneg %p33
        %p167 = pneg %p57
        %p168 = pneg %p54
        %p169 = pneg %p78
        %p170 = pneg %p75
        %p171 = pneg %p104
        %p172 = pneg %p101
        %p173 = scmp.lt.s32.totalorder %s15, 1
        %s174 = scalar_select %p173, %s15, 1
        %s175 = smul.addr %s174, 3
        %s176 = smul.addr %s175, 8
        %s177 = scalar_lea.vmem %s3, %s176
        %p178 = scmp.lt.s32.totalorder %s15, 1
        %s179 = scalar_select %p178, %s15, 1
        %s180 = smul.addr %s179, 3
        %s181 = smul.addr %s180, 8
        %s182 = scalar_lea.vmem %s0, %s181
        %p183 = scmp.lt.s32.totalorder %s15, 1
        %s184 = scalar_select %p183, %s15, 1
        %s185 = smul.addr %s184, 3
        %s186 = smul.addr %s185, 8
        %s187 = scalar_lea.vmem %s3, %s186
        %v188 = vld [vmem:[%s1] sm:$0xff]
        %v189 = vld [vmem:[%s1 + $0x8] sm:$0xff]
        %v190 = vld [vmem:[%s1 + $0x10] sm:$0xff]
        %v191 = vld [vmem:[%s1 + $0x18] sm:$0xff]
        %v192 = vld [vmem:[%s1 + $0x20] sm:$0xff]
        %v193 = vld [vmem:[%s1 + $0x28] sm:$0xff]
        %v194 = vld [vmem:[%s1 + $0x30] sm:$0xff]
        %v195 = vld [vmem:[%s1 + $0x38] sm:$0xff]
        %v196 = vld [vmem:[#allocation2] sm:$0xff]
        %v197 = vld [vmem:[#allocation2 + $0x8] sm:$0xff]
        %v198 = vld [vmem:[#allocation2 + $0x10] sm:$0x1]
        %v199 = vld [vmem:[%s182] sm:$0xff]
        %v200 = vld [vmem:[%s182 + $0x8] sm:$0xff]
        %v201 = vld [vmem:[%s182 + $0x10] sm:$0x1]
        %vm202 = vcmask 523264
        %v204 = vsel %vm202, %v199, 0
        %v207 = vsel %vm202, %v200, 0
        %v210 = vsel %vm202, %v201, 0
        %212 = vmatpush.msra.mxu0 0.0
        %213 = vmatpush.msra.mxu0 0.0
        %214 = vmatpush.msra.mxu0 0.0
        %215 = vmatpush.msra.mxu0 0.0
        %216 = vmatpush.msra.mxu0 0.0
        %217 = vmatpush.msra.mxu0 0.0
        %218 = vmatpush.msra.mxu0 0.0
        %219 = vmatpush.msra.mxu0 0.0
        %220 = vmatpush.msra.mxu0 %v195
        %221 = vmatpush.msra.mxu0 %v194
        %222 = vmatpush.msra.mxu0 %v193
        %223 = vmatpush.msra.mxu0 %v192
        %224 = vmatpush.msra.mxu0 %v191
        %225 = vmatpush.msra.mxu0 %v190
        %226 = vmatpush.msra.mxu0 %v189
        %227 = vmatpush.msra.mxu0 %v188
        %228 = vmatmul.f32.gmra.mxu0 %v204
        %v229 = vpop.f32.mrf.mxu0
        %v230 = vadd.f32 %v196, %v229
        %231 = vmatmul.f32.gmra.mxu0 %v207
        %v232 = vpop.f32.mrf.mxu0
        %v233 = vadd.f32 %v197, %v232
        %234 = vmatmul.f32.gmra.mxu0 %v210
        %v235 = vpop.f32.mrf.mxu0
        %v236 = vadd.f32 %v198, %v235
        %237 = vdwg.mxu0
        %238 = vst [vmem:[%s187] sm:$0xff] %v230
        %239 = vst [vmem:[%s187 + $0x8] sm:$0xff] %v233
        %240 = vst [vmem:[%s187 + $0x10] sm:$0x1] %v236
        %p241 = scmp.lt.s32.totalorder %s15, 1
        %s242 = scalar_select %p241, %s15, 1
        %s243 = smul.addr %s242, 3
        %s244 = smul.addr %s243, 8
        %s245 = scalar_lea.vmem %s3, %s244
        // Predicated region
        $region37: #{tpu_custom_call.1} parent=31 // pred_check
          %p246 = pneg %p101
        $region38: #{tpu_custom_call.1} parent=31 // pred_check_branch
          %248 = sbr.rel (%p246) target = $region40
        $region39: #{tpu_custom_call.1} parent=31 // pred_region
          _
        $region40: #{tpu_custom_call.1} parent=31 // pred_fallthru
          _
      $region32: #{tpu_custom_call.1} parent=5 // pred_fallthru
        _
      %p249 = scmp.le.s32.totalorder 2, %s10
      // Predicated region
      $region41: #{tpu_custom_call.1} parent=5 // pred_check
        %p250 = pneg %p249
      $region42: #{tpu_custom_call.1} parent=5 // pred_check_branch
        %252 = sbr.rel (%p250) target = $region44
      $region43: #{tpu_custom_call.1} parent=5 // pred_region
        %s253 = ssub.s32 %s10, 2
        // Predicated region
        $region45: #{tpu_custom_call.1} parent=43 // pred_check
          %p254 = pneg %p107
        $region46: #{tpu_custom_call.1} parent=43 // pred_check_branch
          %256 = sbr.rel (%p254) target = $region48
        $region47: #{tpu_custom_call.1} parent=43 // pred_region
          %p257 = scmp.lt.s32.totalorder %s16, 1
          %s258 = scalar_select %p257, %s16, 1
          %s259 = smul.addr %s258, 3
          %s260 = smul.addr %s259, 8
          %s261 = scalar_lea.vmem %s3, %s260
        $region48: #{tpu_custom_call.1} parent=43 // pred_fallthru
          _
      $region44: #{tpu_custom_call.1} parent=5 // pred_fallthru
        _
    $region6: #{tpu_custom_call.1} parent=1 // loop_footer
      %s14 = sadd.s32 1, %s10
    $region7: #{tpu_custom_call.1} parent=1 // loop_footer_branch
      %9 = sbr.rel target = $region3
    $region8: #{tpu_custom_call.1} parent=1 // loop_exit
      _
    %262 = vsyncpa [#allocation3], 1
    %s263 = scalar_lea.sflag [#allocation3], 1
    %264 = vsyncpa %s263, 1

// kernel: tpu_custom_call.1
$region0: #{tpu_custom_call.1}
  #allocation0 [shape = 'u32[]', space=smem, size = 0x4, offset = 0x4, fixed_abs, tag = 'smem constant byte address 0x4 - core index']
  #allocation1 [shape = 'u32[72,128]{1,0:T(1,128)}', space=vmem, size = 0x9000, scoped, tag = 'internal scratch']
  %s0 = inlined_call_operand.vmem [shape: f32[2,17,64], index: 0, kind: input, shape index: {}]
  %s1 = inlined_call_operand.vmem [shape: f32[64,128], index: 1, kind: input, shape index: {}]
  %s2 = inlined_call_operand.hbm [shape: f32[17,128], index: 2, kind: input, shape index: {}]
  %s3 = inlined_call_operand.vmem [shape: f32[2,17,128], index: 3, kind: output, shape index: {}]
  %s4 = sld [smem:[#allocation0]]
  $region49: #{tpu_custom_call.1} parent=0
    _
  %s6 = ssub.s32 1, %s4
  %s7 = scalar_select 0, %s6, %s4
  $region1: #{tpu_custom_call.1} parent=0
    #allocation2 [shape = 'u8[12288]{0}', space=vmem, size = 0x3000, scoped, tag = 'input window, operand 2, single buffered']
    #allocation3 [shape = 's32[2]{0}', space=sflag, size = 0x8, scoped, tag = 'scoped memory for tpu_custom_call.1']
    %8 = vsyncpa [#allocation3], 0
    loop: start=0, step=1, limit=4
    $region2: #{tpu_custom_call.1} parent=1 // loop_pre_header
      _
    $region3: #{tpu_custom_call.1} parent=1 // loop_header
      %s10 = sphi 0, %s14
      %p11 = scmp.ge.s32.totalorder %s10, 4
      %s20 = sphi 0, %s22
      %s23 = sphi 0, %s20
      %s24 = sphi 0, %s23
      %s40 = sphi 0, %s24
      %s44 = sphi 0, %s44
      %s46 = sphi 0, %s44
      %s47 = sphi 0, %s46
      %s61 = sphi 0, %s47
      %s65 = sphi 0, %s65
      %s67 = sphi 0, %s65
      %s68 = sphi 0, %s67
      %s82 = sphi 0, %s68
      %s88 = sphi 0, %s90
      %s91 = sphi 0, %s88
      %s92 = sphi 0, %s91
      %s108 = sphi 0, %s92
    $region4: #{tpu_custom_call.1} parent=1 // loop_header_branch
      %13 = sbr.rel (%p11) target = $region8
    $region5: #{tpu_custom_call.1} parent=1 // loop_body
      %s15 = ssub.s32 %s10, 1
      %s16 = ssub.s32 %s10, 2
      %s17 = sadd.s32 %s10, 1
      %s18 = ssub.s32 %s10, %s17
      %p19 = scmp.eq.s32.totalorder %s18, 0
      %s21 = sadd.s32 %s20, 1
      %s22 = scalar_select %p19, %s20, %s21
      %p25 = pneg %p19
      %p26 = scmp.eq.s32.totalorder %s10, 1
      %p27 = por %p25, %p26
      %p28 = scmp.ne.s32.totalorder %s20, %s23
      %p29 = scmp.eq.s32.totalorder %s10, 0
      %p30 = por %p28, %p29
      %p31 = scmp.ne.s32.totalorder %s20, %s23
      %p32 = scmp.eq.s32.totalorder %s15, 1
      %p33 = por %p31, %p32
      %p34 = scmp.ne.s32.totalorder %s23, %s24
      %p35 = scmp.eq.s32.totalorder %s15, 0
      %p36 = por %p34, %p35
      %p37 = scmp.ne.s32.totalorder %s23, %s24
      %p38 = scmp.eq.s32.totalorder %s16, 1
      %p39 = por %p37, %p38
      %p41 = scmp.ne.s32.totalorder %s24, %s40
      %p42 = scmp.eq.s32.totalorder %s16, 0
      %p43 = por %p41, %p42
      %s45 = sadd.s32 %s44, 1
      %p48 = scmp.eq.s32.totalorder %s10, 1
      %p49 = scmp.ne.s32.totalorder %s44, %s46
      %p50 = scmp.eq.s32.totalorder %s10, 0
      %p51 = por %p49, %p50
      %p52 = scmp.ne.s32.totalorder %s44, %s46
      %p53 = scmp.eq.s32.totalorder %s15, 1
      %p54 = por %p52, %p53
      %p55 = scmp.ne.s32.totalorder %s46, %s47
      %p56 = scmp.eq.s32.totalorder %s15, 0
      %p57 = por %p55, %p56
      %p58 = scmp.ne.s32.totalorder %s46, %s47
      %p59 = scmp.eq.s32.totalorder %s16, 1
      %p60 = por %p58, %p59
      %p62 = scmp.ne.s32.totalorder %s47, %s61
      %p63 = scmp.eq.s32.totalorder %s16, 0
      %p64 = por %p62, %p63
      %s66 = sadd.s32 %s65, 1
      %p69 = scmp.eq.s32.totalorder %s10, 1
      %p70 = scmp.ne.s32.totalorder %s65, %s67
      %p71 = scmp.eq.s32.totalorder %s10, 0
      %p72 = por %p70, %p71
      %p73 = scmp.ne.s32.totalorder %s65, %s67
      %p74 = scmp.eq.s32.totalorder %s15, 1
      %p75 = por %p73, %p74
      %p76 = scmp.ne.s32.totalorder %s67, %s68
      %p77 = scmp.eq.s32.totalorder %s15, 0
      %p78 = por %p76, %p77
      %p79 = scmp.ne.s32.totalorder %s67, %s68
      %p80 = scmp.eq.s32.totalorder %s16, 1
      %p81 = por %p79, %p80
      %p83 = scmp.ne.s32.totalorder %s68, %s82
      %p84 = scmp.eq.s32.totalorder %s16, 0
      %p85 = por %p83, %p84
      %s86 = ssub.s32 %s10, %s17
      %p87 = scmp.eq.s32.totalorder %s86, 0
      %s89 = sadd.s32 %s88, 1
      %s90 = scalar_select %p87, %s88, %s89
      %p93 = pneg %p87
      %p94 = scmp.eq.s32.totalorder %s10, 1
      %p95 = por %p93, %p94
      %p96 = scmp.ne.s32.totalorder %s88, %s91
      %p97 = scmp.eq.s32.totalorder %s10, 0
      %p98 = por %p96, %p97
      %p99 = scmp.ne.s32.totalorder %s88, %s91
      %p100 = scmp.eq.s32.totalorder %s15, 1
      %p101 = por %p99, %p100
      %p102 = scmp.ne.s32.totalorder %s91, %s92
      %p103 = scmp.eq.s32.totalorder %s15, 0
      %p104 = por %p102, %p103
      %p105 = scmp.ne.s32.totalorder %s91, %s92
      %p106 = scmp.eq.s32.totalorder %s16, 1
      %p107 = por %p105, %p106
      %p109 = scmp.ne.s32.totalorder %s92, %s108
      %p110 = scmp.eq.s32.totalorder %s16, 0
      %p111 = por %p109, %p110
      %p112 = scmp.le.s32.totalorder 1, %s10
      %p113 = scmp.lt.s32.totalorder %s10, 3
      %p114 = pnand %p112, %p113
      %p115 = pneg %p114
      // Predicated region
      $region9: #{tpu_custom_call.1} parent=5 // pred_check
        _
      $region10: #{tpu_custom_call.1} parent=5 // pred_check_branch
        %117 = sbr.rel (%p114) target = $region12
      $region11: #{tpu_custom_call.1} parent=5 // pred_region
        %s118 = ssub.s32 %s10, 1
        // Predicated region
        $region13: #{tpu_custom_call.1} parent=11 // pred_check
          %p119 = pneg %p57
        $region14: #{tpu_custom_call.1} parent=11 // pred_check_branch
          %121 = sbr.rel (%p119) target = $region16
        $region15: #{tpu_custom_call.1} parent=11 // pred_region
          _
        $region16: #{tpu_custom_call.1} parent=11 // pred_fallthru
          _
        // Predicated region
        $region17: #{tpu_custom_call.1} parent=11 // pred_check
          %p122 = pneg %p78
        $region18: #{tpu_custom_call.1} parent=11 // pred_check_branch
          %124 = sbr.rel (%p122) target = $region20
        $region19: #{tpu_custom_call.1} parent=11 // pred_region
          %126 = vsyncadd [#allocation3], 0
          %s127 = sshll.u32 %s2, 4
          %s128 = int_to_ptr.hbm [resolvable:$true] %s127
          %s129 = sshll.u32 [#allocation2], 4
          %s130 = int_to_ptr.vmem [resolvable:$true] %s129
          %135 = dma.hbm_to_vmem [thread:$0]  %s128, 384, %s130, [#allocation3], 128, 128, 8
        $region20: #{tpu_custom_call.1} parent=11 // pred_fallthru
          _
      $region12: #{tpu_custom_call.1} parent=5 // pred_fallthru
        _
      %p136 = scmp.lt.s32.totalorder %s10, 2
      // Predicated region
      $region21: #{tpu_custom_call.1} parent=5 // pred_check
        %p137 = pneg %p136
      $region22: #{tpu_custom_call.1} parent=5 // pred_check_branch
        %139 = sbr.rel (%p137) target = $region24
      $region23: #{tpu_custom_call.1} parent=5 // pred_region
        // Predicated region
        $region25: #{tpu_custom_call.1} parent=23 // pred_check
          %p140 = pneg %p30
        $region26: #{tpu_custom_call.1} parent=23 // pred_check_branch
          %142 = sbr.rel (%p140) target = $region28
        $region27: #{tpu_custom_call.1} parent=23 // pred_region
          %p143 = scmp.lt.s32.totalorder %s10, 1
          %s144 = scalar_select %p143, %s10, 1
          %s145 = smul.addr %s144, 3
          %s146 = smul.addr %s145, 8
          %s147 = scalar_lea.vmem %s0, %s146
        $region28: #{tpu_custom_call.1} parent=23 // pred_fallthru
          _
      $region24: #{tpu_custom_call.1} parent=5 // pred_fallthru
        _
      %p148 = scmp.le.s32.totalorder 1, %s10
      %p149 = scmp.lt.s32.totalorder %s10, 3
      %p150 = pnand %p148, %p149
      %p151 = pneg %p150
      // Predicated region
      $region29: #{tpu_custom_call.1} parent=5 // pred_check
        _
      $region30: #{tpu_custom_call.1} parent=5 // pred_check_branch
        %153 = sbr.rel (%p150) target = $region32
      $region31: #{tpu_custom_call.1} parent=5 // pred_region
        %s154 = ssub.s32 %s10, 1
        // Predicated region
        $region33: #{tpu_custom_call.1} parent=31 // pred_check
          %p155 = pneg %p78
        $region34: #{tpu_custom_call.1} parent=31 // pred_check_branch
          %157 = sbr.rel (%p155) target = $region36
        $region35: #{tpu_custom_call.1} parent=31 // pred_region
          %159 = dma.done [#allocation3], 384
        $region36: #{tpu_custom_call.1} parent=31 // pred_fallthru
          _
        %p160 = scmp.lt.s32.totalorder %s15, 1
        %s161 = scalar_select %p160, %s15, 1
        %s162 = smul.addr %s161, 3
        %s163 = smul.addr %s162, 8
        %s164 = scalar_lea.vmem %s0, %s163
        %p165 = pneg %p36
        %p166 = pneg %p33
        %p167 = pneg %p57
        %p168 = pneg %p54
        %p169 = pneg %p78
        %p170 = pneg %p75
        %p171 = pneg %p104
        %p172 = pneg %p101
        %p173 = scmp.lt.s32.totalorder %s15, 1
        %s174 = scalar_select %p173, %s15, 1
        %s175 = smul.addr %s174, 3
        %s176 = smul.addr %s175, 8
        %s177 = scalar_lea.vmem %s3, %s176
        %p178 = scmp.lt.s32.totalorder %s15, 1
        %s179 = scalar_select %p178, %s15, 1
        %s180 = smul.addr %s179, 3
        %s181 = smul.addr %s180, 8
        %s182 = scalar_lea.vmem %s0, %s181
        %p183 = scmp.lt.s32.totalorder %s15, 1
        %s184 = scalar_select %p183, %s15, 1
        %s185 = smul.addr %s184, 3
        %s186 = smul.addr %s185, 8
        %s187 = scalar_lea.vmem %s3, %s186
        %v188 = vld [vmem:[%s1] sm:$0xff]
        %v189 = vld [vmem:[%s1 + $0x8] sm:$0xff]
        %v190 = vld [vmem:[%s1 + $0x10] sm:$0xff]
        %v191 = vld [vmem:[%s1 + $0x18] sm:$0xff]
        %v192 = vld [vmem:[%s1 + $0x20] sm:$0xff]
        %v193 = vld [vmem:[%s1 + $0x28] sm:$0xff]
        %v194 = vld [vmem:[%s1 + $0x30] sm:$0xff]
        %v195 = vld [vmem:[%s1 + $0x38] sm:$0xff]
        %v196 = vld [vmem:[#allocation2] sm:$0xff]
        %v197 = vld [vmem:[#allocation2 + $0x8] sm:$0xff]
        %v198 = vld [vmem:[#allocation2 + $0x10] sm:$0x1]
        %v199 = vld [vmem:[%s182] sm:$0xff]
        %v200 = vld [vmem:[%s182 + $0x8] sm:$0xff]
        %v201 = vld [vmem:[%s182 + $0x10] sm:$0x1]
        %vm202 = vcmask 523264
        %v204 = vsel %vm202, %v199, 0
        %v207 = vsel %vm202, %v200, 0
        %v210 = vsel %vm202, %v201, 0
        %212 = vmatpush.msra.mxu0 0.0
        %213 = vmatpush.msra.mxu0 0.0
        %214 = vmatpush.msra.mxu0 0.0
        %215 = vmatpush.msra.mxu0 0.0
        %216 = vmatpush.msra.mxu0 0.0
        %217 = vmatpush.msra.mxu0 0.0
        %218 = vmatpush.msra.mxu0 0.0
        %219 = vmatpush.msra.mxu0 0.0
        %220 = vmatpush.msra.mxu0 %v195
        %221 = vmatpush.msra.mxu0 %v194
        %222 = vmatpush.msra.mxu0 %v193
        %223 = vmatpush.msra.mxu0 %v192
        %224 = vmatpush.msra.mxu0 %v191
        %225 = vmatpush.msra.mxu0 %v190
        %226 = vmatpush.msra.mxu0 %v189
        %227 = vmatpush.msra.mxu0 %v188
        %228 = vmatmul.f32.gmra.mxu0 %v204
        %v229 = vpop.f32.mrf.mxu0
        %v230 = vadd.f32 %v196, %v229
        %231 = vmatmul.f32.gmra.mxu0 %v207
        %v232 = vpop.f32.mrf.mxu0
        %v233 = vadd.f32 %v197, %v232
        %234 = vmatmul.f32.gmra.mxu0 %v210
        %v235 = vpop.f32.mrf.mxu0
        %v236 = vadd.f32 %v198, %v235
        %237 = vdwg.mxu0
        %238 = vst [vmem:[%s187] sm:$0xff] %v230
        %239 = vst [vmem:[%s187 + $0x8] sm:$0xff] %v233
        %240 = vst [vmem:[%s187 + $0x10] sm:$0x1] %v236
        %p241 = scmp.lt.s32.totalorder %s15, 1
        %s242 = scalar_select %p241, %s15, 1
        %s243 = smul.addr %s242, 3
        %s244 = smul.addr %s243, 8
        %s245 = scalar_lea.vmem %s3, %s244
        // Predicated region
        $region37: #{tpu_custom_call.1} parent=31 // pred_check
          %p246 = pneg %p101
        $region38: #{tpu_custom_call.1} parent=31 // pred_check_branch
          %248 = sbr.rel (%p246) target = $region40
        $region39: #{tpu_custom_call.1} parent=31 // pred_region
          _
        $region40: #{tpu_custom_call.1} parent=31 // pred_fallthru
          _
      $region32: #{tpu_custom_call.1} parent=5 // pred_fallthru
        _
      %p249 = scmp.le.s32.totalorder 2, %s10
      // Predicated region
      $region41: #{tpu_custom_call.1} parent=5 // pred_check
        %p250 = pneg %p249
      $region42: #{tpu_custom_call.1} parent=5 // pred_check_branch
        %252 = sbr.rel (%p250) target = $region44
      $region43: #{tpu_custom_call.1} parent=5 // pred_region
        %s253 = ssub.s32 %s10, 2
        // Predicated region
        $region45: #{tpu_custom_call.1} parent=43 // pred_check
          %p254 = pneg %p107
        $region46: #{tpu_custom_call.1} parent=43 // pred_check_branch
          %256 = sbr.rel (%p254) target = $region48
        $region47: #{tpu_custom_call.1} parent=43 // pred_region
          %p257 = scmp.lt.s32.totalorder %s16, 1
          %s258 = scalar_select %p257, %s16, 1
          %s259 = smul.addr %s258, 3
          %s260 = smul.addr %s259, 8
          %s261 = scalar_lea.vmem %s3, %s260
        $region48: #{tpu_custom_call.1} parent=43 // pred_fallthru
          _
      $region44: #{tpu_custom_call.1} parent=5 // pred_fallthru
        _
    $region6: #{tpu_custom_call.1} parent=1 // loop_footer
      %s14 = sadd.s32 1, %s10
    $region7: #{tpu_custom_call.1} parent=1 // loop_footer_branch
      %9 = sbr.rel target = $region3
    $region8: #{tpu_custom_call.1} parent=1 // loop_exit
      _
    %262 = vsyncpa [#allocation3], 1
    %s263 = scalar_lea.sflag [#allocation3], 1
    %264 = vsyncpa %s263, 1

</llo_original>
